<compile_context>
chip_gen: v5e
topology: v5e:2x2
jax: 0.10.0
libtpu: 0.0.40
codegen_flags: <defaults>
</compile_context>

<pallas_src>
import jax
import jax.numpy as jnp
from jax.experimental import pallas as pl
from jax.experimental.pallas import tpu as pltpu


def _round_up(x, m):
    return ((x + m - 1) // m) * m


def _posterior_gaussian_kernel(h_ref, w_ref, b_ref, pmu_ref, plv_ref, eps_ref, out_ref):
    # Linear: mu_z(h).  The module applies mu_z twice (ll_mu == ll_logvar), so one matmul.
    ll = jnp.dot(h_ref[...], w_ref[...],
                 preferred_element_type=jnp.float32) + b_ref[...]

    ll_prec = jnp.exp(-0.5 * ll)
    prior_prec = jnp.exp(-0.5 * plv_ref[...])

    denom = prior_prec + ll_prec
    # Exact reciprocal (approx=False): post_logvar may feed a KL term, keep it precise.
    post_prec = pl.reciprocal(denom)
    post_mu = (pmu_ref[...] * prior_prec + ll * ll_prec) * post_prec
    post_logvar = -jnp.log(post_prec + 1e-8)

    # std = exp(0.5 * post_logvar) == (post_prec + 1e-8) ** -0.5  -> single rsqrt,
    # no serial log->exp round trip on the EUP.
    std = jax.lax.rsqrt(post_prec + 1e-8)
    z = post_mu + std * eps_ref[...]

    # Single fused (3, TB, Dp) output slab; each store is a 128-lane-dense (unmasked) store.
    out_ref[0] = post_mu
    out_ref[1] = post_logvar
    out_ref[2] = z


def posterior_gaussian(h, w, b, prior_mu, prior_logvar, eps, *, block_b=512):
    """h: (B, D_in); w: (D_in, D_lat) (pre-transposed Linear weight); b: (1, D_lat);
    prior_mu / prior_logvar / eps: (B, D_lat).  Returns (post_mu, post_logvar, z)."""
    B, D_in = h.shape
    D_lat = w.shape[1]

    # Pad the latent (lane) dim to a multiple of 128 -> lane-dense compute & stores.
    Dp = _round_up(D_lat, 128)
    # Batch (sublane) tiling: tile must be a multiple of 8; pad batch to a multiple of it.
    B8 = _round_up(B, 8)
    TB = min(_round_up(block_b, 8), B8)
    Bp = _round_up(B8, TB)

    def pad2(x, rows, cols):
        return jnp.pad(x, ((0, rows - x.shape[0]), (0, cols - x.shape[1])))

    f32 = jnp.float32
    h_p = pad2(h.astype(f32), Bp, D_in)
    w_p = pad2(w.astype(f32), D_in, Dp)
    b_p = pad2(b.astype(f32), 1, Dp)
    pmu_p = pad2(prior_mu.astype(f32), Bp, Dp)
    plv_p = pad2(prior_logvar.astype(f32), Bp, Dp)
    eps_p = pad2(eps.astype(f32), Bp, Dp)

    grid = (Bp // TB,)

    out = pl.pallas_call(
        _posterior_gaussian_kernel,
        out_shape=jax.ShapeDtypeStruct((3, Bp, Dp), f32),
        grid_spec=pltpu.PrefetchScalarGridSpec(
            num_scalar_prefetch=0,
            grid=grid,
            in_specs=[
                pl.BlockSpec((TB, D_in), lambda i: (i, 0)),   # h      (batch-tiled)
                pl.BlockSpec((D_in, Dp), lambda i: (0, 0)),   # weight (resident)
                pl.BlockSpec((1, Dp),    lambda i: (0, 0)),   # bias   (resident)
                pl.BlockSpec((TB, Dp),   lambda i: (i, 0)),   # prior_mu
                pl.BlockSpec((TB, Dp),   lambda i: (i, 0)),   # prior_logvar
                pl.BlockSpec((TB, Dp),   lambda i: (i, 0)),   # eps
            ],
            out_specs=pl.BlockSpec((3, TB, Dp), lambda i: (0, i, 0)),
        ),
        compiler_params=pltpu.CompilerParams(
            dimension_semantics=("parallel",)),
    )(h_p, w_p, b_p, pmu_p, plv_p, eps_p)

    post_mu = out[0, :B, :D_lat]
    post_logvar = out[1, :B, :D_lat]
    z = out[2, :B, :D_lat]
    return post_mu, post_logvar, z


def _reference(h, w, b, prior_mu, prior_logvar, eps):
    ll = h @ w + b
    ll_prec = jnp.exp(-0.5 * ll)
    prior_prec = jnp.exp(-0.5 * prior_logvar)
    post_prec = 1.0 / (prior_prec + ll_prec)
    post_mu = (prior_mu * prior_prec + ll * ll_prec) * post_prec
    post_logvar = -jnp.log(post_prec + 1e-8)
    z = post_mu + jnp.exp(0.5 * post_logvar) * eps
    return post_mu, post_logvar, z


if __name__ == "__main__":
    key = jax.random.PRNGKey(0)
    B, D_in, D_lat = 8, 32, 16

    k_h, k_pm, k_pl, k_w, k_b, k_eps = jax.random.split(key, 6)

    # Inputs: (h, (prior_mu, prior_logvar))
    h = jax.random.normal(k_h, (B, D_in), dtype=jnp.float32)
    prior_mu = jax.random.normal(k_pm, (B, D_lat), dtype=jnp.float32)
    prior_logvar = 0.1 * jax.random.normal(k_pl, (B, D_lat), dtype=jnp.float32)

    # Deterministic parameter init for mu_z = nn.Linear(D_in, D_lat):
    # kaiming-normal weight (std = sqrt(2 / fan_in)), zero bias.
    w_mu = jax.random.normal(k_w, (D_in, D_lat), dtype=jnp.float32) * jnp.sqrt(2.0 / D_in)
    b_mu = jnp.zeros((1, D_lat), dtype=jnp.float32)

    # Deterministic reparameterization noise (module is in training mode by default).
    eps = jax.random.normal(k_eps, (B, D_lat), dtype=jnp.float32)

    post_mu, post_logvar, z = posterior_gaussian(h, w_mu, b_mu, prior_mu,
                                                 prior_logvar, eps)
    jax.block_until_ready((post_mu, post_logvar, z))

    ref_mu, ref_lv, ref_z = _reference(h, w_mu, b_mu, prior_mu, prior_logvar, eps)
    assert jnp.allclose(post_mu, ref_mu, atol=1e-5, rtol=1e-5)
    assert jnp.allclose(post_logvar, ref_lv, atol=1e-5, rtol=1e-5)
    assert jnp.allclose(z, ref_z, atol=1e-5, rtol=1e-5)

    print("KERNEL_OK")
</pallas_src>

<mosaic_0001>
module attributes {stable_mosaic.version = 11 : i64} {
  func.func @_posterior_gaussian_kernel(%arg0: i32, %arg1: memref<8x32xf32, #tpu.memory_space<vmem>>, %arg2: memref<32x128xf32, #tpu.memory_space<vmem>>, %arg3: memref<1x128xf32, #tpu.memory_space<vmem>>, %arg4: memref<8x128xf32, #tpu.memory_space<vmem>>, %arg5: memref<8x128xf32, #tpu.memory_space<vmem>>, %arg6: memref<8x128xf32, #tpu.memory_space<vmem>>, %arg7: memref<3x8x128xf32, #tpu.memory_space<vmem>>) attributes {dimension_semantics = [#tpu.dimension_semantics<parallel>], iteration_bounds = array<i64: 1>, scalar_prefetch = 0 : i64, scratch_operands = 0 : i64, tpu.core_type = #tpu.core_type<tc>, window_params = [{transform_indices = @transform_0, window_bounds = array<i64: 8, 32>}, {pipeline_mode = #tpu.pipeline_mode<synchronous>, transform_indices = @transform_1, window_bounds = array<i64: 32, 128>}, {pipeline_mode = #tpu.pipeline_mode<synchronous>, transform_indices = @transform_2, window_bounds = array<i64: 1, 128>}, {transform_indices = @transform_3, window_bounds = array<i64: 8, 128>}, {transform_indices = @transform_4, window_bounds = array<i64: 8, 128>}, {transform_indices = @transform_5, window_bounds = array<i64: 8, 128>}, {transform_indices = @transform_6, window_bounds = array<i64: 3, 8, 128>}]} {
    %c0 = arith.constant 0 : index
    %c0_0 = arith.constant 0 : index
    %0 = vector.load %arg1[%c0, %c0_0] : memref<8x32xf32, #tpu.memory_space<vmem>>, vector<8x32xf32>
    %c0_1 = arith.constant 0 : index
    %c0_2 = arith.constant 0 : index
    %1 = vector.load %arg2[%c0_1, %c0_2] : memref<32x128xf32, #tpu.memory_space<vmem>>, vector<32x128xf32>
    %cst = arith.constant dense<0.000000e+00> : vector<8x128xf32>
    %2 = tpu.matmul %0, %1, %cst {dimension_numbers = #tpu.dot_dimension_numbers<[1], [0], [0], [1], [0, 0, 1, 1], [], []>} : vector<8x32xf32>, vector<32x128xf32>, vector<8x128xf32> -> vector<8x128xf32>
    %c0_3 = arith.constant 0 : index
    %c0_4 = arith.constant 0 : index
    %3 = vector.load %arg3[%c0_3, %c0_4] : memref<1x128xf32, #tpu.memory_space<vmem>>, vector<1x128xf32>
    %4 = vector.broadcast %3 : vector<1x128xf32> to vector<8x128xf32>
    %5 = arith.addf %2, %4 : vector<8x128xf32>
    %cst_5 = arith.constant -5.000000e-01 : f32
    %6 = vector.broadcast %cst_5 : f32 to vector<8x128xf32>
    %7 = arith.mulf %6, %5 : vector<8x128xf32>
    %8 = math.exp %7 : vector<8x128xf32>
    %c0_6 = arith.constant 0 : index
    %c0_7 = arith.constant 0 : index
    %9 = vector.load %arg5[%c0_6, %c0_7] : memref<8x128xf32, #tpu.memory_space<vmem>>, vector<8x128xf32>
    %cst_8 = arith.constant -5.000000e-01 : f32
    %10 = vector.broadcast %cst_8 : f32 to vector<8x128xf32>
    %11 = arith.mulf %10, %9 : vector<8x128xf32>
    %12 = math.exp %11 : vector<8x128xf32>
    %13 = arith.addf %12, %8 : vector<8x128xf32>
    %14 = tpu.reciprocal %13 : vector<8x128xf32> -> vector<8x128xf32>
    %c0_9 = arith.constant 0 : index
    %c0_10 = arith.constant 0 : index
    %15 = vector.load %arg4[%c0_9, %c0_10] : memref<8x128xf32, #tpu.memory_space<vmem>>, vector<8x128xf32>
    %16 = arith.mulf %15, %12 : vector<8x128xf32>
    %17 = arith.mulf %5, %8 : vector<8x128xf32>
    %18 = arith.addf %16, %17 : vector<8x128xf32>
    %19 = arith.mulf %18, %14 : vector<8x128xf32>
    %cst_11 = arith.constant 9.99999993E-9 : f32
    %20 = vector.broadcast %cst_11 : f32 to vector<8x128xf32>
    %21 = arith.addf %14, %20 : vector<8x128xf32>
    %22 = math.log %21 : vector<8x128xf32>
    %cst_12 = arith.constant 0.000000e+00 : f32
    %23 = vector.broadcast %cst_12 : f32 to vector<8x128xf32>
    %24 = arith.subf %23, %22 : vector<8x128xf32>
    %cst_13 = arith.constant 9.99999993E-9 : f32
    %25 = vector.broadcast %cst_13 : f32 to vector<8x128xf32>
    %26 = arith.addf %14, %25 : vector<8x128xf32>
    %27 = math.rsqrt %26 : vector<8x128xf32>
    %c0_14 = arith.constant 0 : index
    %c0_15 = arith.constant 0 : index
    %28 = vector.load %arg6[%c0_14, %c0_15] : memref<8x128xf32, #tpu.memory_space<vmem>>, vector<8x128xf32>
    %29 = arith.mulf %27, %28 : vector<8x128xf32>
    %30 = arith.addf %19, %29 : vector<8x128xf32>
    %c0_16 = arith.constant 0 : index
    %c0_17 = arith.constant 0 : index
    %c0_18 = arith.constant 0 : index
    %31 = vector.load %arg7[%c0_16, %c0_17, %c0_18] : memref<3x8x128xf32, #tpu.memory_space<vmem>>, vector<1x8x128xf32>
    %32 = vector.shape_cast %31 : vector<1x8x128xf32> to vector<8x128xf32>
    %33 = vector.shape_cast %19 : vector<8x128xf32> to vector<1x8x128xf32>
    tpu.vector_store %arg7[%c0_16, %c0_17, %c0_18], %33 {strides = array<i32>} : memref<3x8x128xf32, #tpu.memory_space<vmem>>, vector<1x8x128xf32>,
    %c1 = arith.constant 1 : index
    %c0_19 = arith.constant 0 : index
    %c0_20 = arith.constant 0 : index
    %34 = vector.load %arg7[%c1, %c0_19, %c0_20] : memref<3x8x128xf32, #tpu.memory_space<vmem>>, vector<1x8x128xf32>
    %35 = vector.shape_cast %34 : vector<1x8x128xf32> to vector<8x128xf32>
    %36 = vector.shape_cast %24 : vector<8x128xf32> to vector<1x8x128xf32>
    tpu.vector_store %arg7[%c1, %c0_19, %c0_20], %36 {strides = array<i32>} : memref<3x8x128xf32, #tpu.memory_space<vmem>>, vector<1x8x128xf32>,
    %c2 = arith.constant 2 : index
    %c0_21 = arith.constant 0 : index
    %c0_22 = arith.constant 0 : index
    %37 = vector.load %arg7[%c2, %c0_21, %c0_22] : memref<3x8x128xf32, #tpu.memory_space<vmem>>, vector<1x8x128xf32>
    %38 = vector.shape_cast %37 : vector<1x8x128xf32> to vector<8x128xf32>
    %39 = vector.shape_cast %30 : vector<8x128xf32> to vector<1x8x128xf32>
    tpu.vector_store %arg7[%c2, %c0_21, %c0_22], %39 {strides = array<i32>} : memref<3x8x128xf32, #tpu.memory_space<vmem>>, vector<1x8x128xf32>,
    return
  }
  func.func @transform_0(%arg0: i32) -> (i32, i32) {
    %c0_i32 = arith.constant 0 : i32
    %c0_i32_0 = arith.constant 0 : i32
    return %arg0, %c0_i32 : i32, i32
  }
  func.func @transform_1(%arg0: i32) -> (i32, i32) {
    %c0_i32 = arith.constant 0 : i32
    %c0_i32_0 = arith.constant 0 : i32
    %c0_i32_1 = arith.constant 0 : i32
    return %c0_i32, %c0_i32_0 : i32, i32
  }
  func.func @transform_2(%arg0: i32) -> (i32, i32) {
    %c0_i32 = arith.constant 0 : i32
    %c0_i32_0 = arith.constant 0 : i32
    %c0_i32_1 = arith.constant 0 : i32
    return %c0_i32, %c0_i32_0 : i32, i32
  }
  func.func @transform_3(%arg0: i32) -> (i32, i32) {
    %c0_i32 = arith.constant 0 : i32
    %c0_i32_0 = arith.constant 0 : i32
    return %arg0, %c0_i32 : i32, i32
  }
  func.func @transform_4(%arg0: i32) -> (i32, i32) {
    %c0_i32 = arith.constant 0 : i32
    %c0_i32_0 = arith.constant 0 : i32
    return %arg0, %c0_i32 : i32, i32
  }
  func.func @transform_5(%arg0: i32) -> (i32, i32) {
    %c0_i32 = arith.constant 0 : i32
    %c0_i32_0 = arith.constant 0 : i32
    return %arg0, %c0_i32 : i32, i32
  }
  func.func @transform_6(%arg0: i32) -> (i32, i32, i32) {
    %c0_i32 = arith.constant 0 : i32
    %c0_i32_0 = arith.constant 0 : i32
    %c0_i32_1 = arith.constant 0 : i32
    return %c0_i32, %arg0, %c0_i32_0 : i32, i32, i32
  }
}

</mosaic_0001>

<llo_original>
// kernel: tpu_custom_call.1
$region0: #{tpu_custom_call.1}
  #allocation0 [shape = 'u32[]', space=smem, size = 0x4, offset = 0x4, fixed_abs, tag = 'smem constant byte address 0x4 - core index']
  #allocation1 [shape = 'u32[72,128]{1,0:T(1,128)}', space=vmem, size = 0x9000, scoped, tag = 'internal scratch']
  %s0 = inlined_call_operand.hbm [shape: f32[8,32], index: 0, kind: input, shape index: {}]
  %s1 = inlined_call_operand.hbm [shape: f32[32,128], index: 1, kind: input, shape index: {}]
  %s2 = inlined_call_operand.vmem [shape: f32[1,128], index: 2, kind: input, shape index: {}]
  %s3 = inlined_call_operand.hbm [shape: f32[8,128], index: 3, kind: input, shape index: {}]
  %s4 = inlined_call_operand.hbm [shape: f32[8,128], index: 4, kind: input, shape index: {}]
  %s5 = inlined_call_operand.hbm [shape: f32[8,128], index: 5, kind: input, shape index: {}]
  %s6 = inlined_call_operand.hbm [shape: f32[3,8,128], index: 6, kind: output, shape index: {}]
  %s7 = sld [smem:[#allocation0]]
  $region54: #{tpu_custom_call.1} parent=0
    _
  %s9 = ssub.s32 1, %s7
  %s10 = scalar_select 0, %s9, %s7
  $region1: #{tpu_custom_call.1} parent=0
    #allocation2 [shape = 'u8[4096]{0}', space=vmem, size = 0x1000, scoped, tag = 'input window, operand 0, single buffered']
    #allocation3 [shape = 's32[1]{0}', space=sflag, size = 0x4, scoped, tag = 'scoped memory for tpu_custom_call.1']
    #allocation4 [shape = 's32[1]{0}', space=sflag, size = 0x4, scoped, tag = 'scoped memory for tpu_custom_call.1']
    #allocation5 [shape = 'u8[16384]{0}', space=vmem, size = 0x4000, scoped, tag = 'input window, operand 1, single buffered']
    #allocation6 [shape = 's32[1]{0}', space=sflag, size = 0x4, scoped, tag = 'scoped memory for tpu_custom_call.1']
    #allocation7 [shape = 'u8[4096]{0}', space=vmem, size = 0x1000, scoped, tag = 'input window, operand 3, single buffered']
    #allocation8 [shape = 'u8[4096]{0}', space=vmem, size = 0x1000, scoped, tag = 'input window, operand 4, single buffered']
    #allocation9 [shape = 's32[1]{0}', space=sflag, size = 0x4, scoped, tag = 'scoped memory for tpu_custom_call.1']
    #allocation10 [shape = 'u8[4096]{0}', space=vmem, size = 0x1000, scoped, tag = 'input window, operand 5, single buffered']
    #allocation11 [shape = 'u8[12288]{0}', space=vmem, size = 0x3000, scoped, tag = 'output window, operand 0, single buffered']
    %11 = vsyncpa [#allocation3], 0
    %12 = vsyncpa [#allocation6], 0
    %13 = vsyncpa [#allocation9], 0
    %14 = vsyncpa [#allocation4], 0
    // Predicated region
    $region2: #{tpu_custom_call.1} parent=1 // pred_check
      _
    $region3: #{tpu_custom_call.1} parent=1 // pred_check_branch
      %16 = sbr.rel (0) target = $region5
    $region4: #{tpu_custom_call.1} parent=1 // pred_region
      %18 = vsyncadd [#allocation3], 0
      %s20 = sshll.u32 %s0, 4
      %s21 = int_to_ptr.hbm [resolvable:$true] %s20
      %s22 = sshll.u32 [#allocation2], 4
      %s23 = int_to_ptr.vmem [resolvable:$true] %s22
      %25 = dma.hbm_to_vmem [thread:$0]  %s21, 128, %s23, [#allocation3]
    $region5: #{tpu_custom_call.1} parent=1 // pred_fallthru
      _
    // Predicated region
    $region6: #{tpu_custom_call.1} parent=1 // pred_check
      _
    $region7: #{tpu_custom_call.1} parent=1 // pred_check_branch
      %27 = sbr.rel (0) target = $region9
    $region8: #{tpu_custom_call.1} parent=1 // pred_region
      %29 = vsyncadd [#allocation6], 0
      %s30 = sshll.u32 %s1, 4
      %s31 = int_to_ptr.hbm [resolvable:$true] %s30
      %s32 = sshll.u32 [#allocation5], 4
      %s33 = int_to_ptr.vmem [resolvable:$true] %s32
      %38 = dma.hbm_to_vmem [thread:$0]  %s31, 512, %s33, [#allocation6], 128, 128, 8
    $region9: #{tpu_custom_call.1} parent=1 // pred_fallthru
      _
    // Predicated region
    $region10: #{tpu_custom_call.1} parent=1 // pred_check
      _
    $region11: #{tpu_custom_call.1} parent=1 // pred_check_branch
      %40 = sbr.rel (0) target = $region13
    $region12: #{tpu_custom_call.1} parent=1 // pred_region
      _
    $region13: #{tpu_custom_call.1} parent=1 // pred_fallthru
      _
    // Predicated region
    $region14: #{tpu_custom_call.1} parent=1 // pred_check
      _
    $region15: #{tpu_custom_call.1} parent=1 // pred_check_branch
      %42 = sbr.rel (0) target = $region17
    $region16: #{tpu_custom_call.1} parent=1 // pred_region
      %44 = vsyncadd [#allocation6], 0
      %s46 = sshll.u32 %s3, 4
      %s47 = int_to_ptr.hbm [resolvable:$true] %s46
      %s48 = sshll.u32 [#allocation7], 4
      %s49 = int_to_ptr.vmem [resolvable:$true] %s48
      %51 = dma.hbm_to_vmem [thread:$0]  %s47, 128, %s49, [#allocation6]
    $region17: #{tpu_custom_call.1} parent=1 // pred_fallthru
      _
    // Predicated region
    $region18: #{tpu_custom_call.1} parent=1 // pred_check
      _
    $region19: #{tpu_custom_call.1} parent=1 // pred_check_branch
      %53 = sbr.rel (0) target = $region21
    $region20: #{tpu_custom_call.1} parent=1 // pred_region
      %55 = vsyncadd [#allocation9], 0
      %s57 = sshll.u32 %s4, 4
      %s58 = int_to_ptr.hbm [resolvable:$true] %s57
      %s59 = sshll.u32 [#allocation8], 4
      %s60 = int_to_ptr.vmem [resolvable:$true] %s59
      %62 = dma.hbm_to_vmem [thread:$0]  %s58, 128, %s60, [#allocation9]
    $region21: #{tpu_custom_call.1} parent=1 // pred_fallthru
      _
    // Predicated region
    $region22: #{tpu_custom_call.1} parent=1 // pred_check
      _
    $region23: #{tpu_custom_call.1} parent=1 // pred_check_branch
      %64 = sbr.rel (0) target = $region25
    $region24: #{tpu_custom_call.1} parent=1 // pred_region
      %66 = vsyncadd [#allocation9], 0
      %s68 = sshll.u32 %s5, 4
      %s69 = int_to_ptr.hbm [resolvable:$true] %s68
      %s70 = sshll.u32 [#allocation10], 4
      %s71 = int_to_ptr.vmem [resolvable:$true] %s70
      %73 = dma.hbm_to_vmem [thread:$0]  %s69, 128, %s71, [#allocation9]
    $region25: #{tpu_custom_call.1} parent=1 // pred_fallthru
      _
    // Predicated region
    $region26: #{tpu_custom_call.1} parent=1 // pred_check
      _
    $region27: #{tpu_custom_call.1} parent=1 // pred_check_branch
      %75 = sbr.rel (0) target = $region29
    $region28: #{tpu_custom_call.1} parent=1 // pred_region
      %77 = dma.done [#allocation3], 128
    $region29: #{tpu_custom_call.1} parent=1 // pred_fallthru
      _
    // Predicated region
    $region30: #{tpu_custom_call.1} parent=1 // pred_check
      _
    $region31: #{tpu_custom_call.1} parent=1 // pred_check_branch
      %79 = sbr.rel (0) target = $region33
    $region32: #{tpu_custom_call.1} parent=1 // pred_region
      %81 = dma.done [#allocation6], 512
    $region33: #{tpu_custom_call.1} parent=1 // pred_fallthru
      _
    // Predicated region
    $region34: #{tpu_custom_call.1} parent=1 // pred_check
      _
    $region35: #{tpu_custom_call.1} parent=1 // pred_check_branch
      %83 = sbr.rel (0) target = $region37
    $region36: #{tpu_custom_call.1} parent=1 // pred_region
      %85 = dma.done [#allocation6], 128
    $region37: #{tpu_custom_call.1} parent=1 // pred_fallthru
      _
    // Predicated region
    $region38: #{tpu_custom_call.1} parent=1 // pred_check
      _
    $region39: #{tpu_custom_call.1} parent=1 // pred_check_branch
      %87 = sbr.rel (0) target = $region41
    $region40: #{tpu_custom_call.1} parent=1 // pred_region
      %89 = dma.done [#allocation9], 128
    $region41: #{tpu_custom_call.1} parent=1 // pred_fallthru
      _
    // Predicated region
    $region42: #{tpu_custom_call.1} parent=1 // pred_check
      _
    $region43: #{tpu_custom_call.1} parent=1 // pred_check_branch
      %91 = sbr.rel (0) target = $region45
    $region44: #{tpu_custom_call.1} parent=1 // pred_region
      %93 = dma.done [#allocation9], 128
    $region45: #{tpu_custom_call.1} parent=1 // pred_fallthru
      _
    %v94 = vld [vmem:[#allocation2] sm:$0xff]
    %v95 = vld [vmem:[#allocation5] sm:$0xff]
    %v96 = vld [vmem:[#allocation5 + $0x8] sm:$0xff]
    %v97 = vld [vmem:[#allocation5 + $0x10] sm:$0xff]
    %v98 = vld [vmem:[#allocation5 + $0x18] sm:$0xff]
    %v99 = vld [vmem:[%s2] sm:$0x1]
    %v101 = vperm.slane %v99, 0
    %vm103 = vcmask 261120
    %v105 = vsel %vm103, %v94, 0
    %107 = vmatpush.msra.mxu0 0.0
    %108 = vmatpush.msra.mxu0 0.0
    %109 = vmatpush.msra.mxu0 0.0
    %110 = vmatpush.msra.mxu0 0.0
    %111 = vmatpush.msra.mxu0 0.0
    %112 = vmatpush.msra.mxu0 0.0
    %113 = vmatpush.msra.mxu0 0.0
    %114 = vmatpush.msra.mxu0 0.0
    %115 = vmatpush.msra.mxu0 0.0
    %116 = vmatpush.msra.mxu0 0.0
    %117 = vmatpush.msra.mxu0 0.0
    %118 = vmatpush.msra.mxu0 0.0
    %119 = vmatpush.msra.mxu0 %v98
    %120 = vmatpush.msra.mxu0 %v97
    %121 = vmatpush.msra.mxu0 %v96
    %122 = vmatpush.msra.mxu0 %v95
    %123 = vmatmul.f32.gmra.mxu0 %v105
    %v124 = vpop.f32.mrf.mxu0
    %v125 = vadd.f32 %v101, %v124
    %126 = vdwg.mxu0
    %v127 = vmul.f32 %v125, -0.5
    %v128 = vmul.f32 %v127, 1.442695
    %v129 = vpow.pop %v128
    %v130 = vld [vmem:[#allocation8] sm:$0xff]
    %v131 = vmul.f32 %v130, -0.5
    %v132 = vmul.f32 %v131, 1.442695
    %v133 = vpow.pop %v132
    %v134 = vadd.f32 %v133, %v129
    %v135 = vrcp.pop %v134
    %v136 = vmul.f32 %v134, %v135
    %v137 = vsub.f32 1.0, %v136
    %v138 = vmul.f32 %v135, %v137
    %v139 = vadd.f32 %v135, %v138
    %vm140 = vweird.f32 %v134
    %vm141 = vweird.f32 %v135
    %vm142 = vmor %vm140, %vm141
    %v143 = vsel %vm142, %v135, %v139
    %v144 = vand.u32 2147483647, %v134
    %vm145 = vcmp.eq.f32.partialorder %v144, 8.507059e+37
    %v146 = vand.u32 %v134, 2147483648
    %v147 = vor.u32 1.1754944e-38, %v146
    %v148 = vsel %vm145, %v147, %v143
    %v149 = vld [vmem:[#allocation7] sm:$0xff]
    %v150 = vmul.f32 %v149, %v133
    %v151 = vmul.f32 %v125, %v129
    %v152 = vadd.f32 %v150, %v151
    %v153 = vmul.f32 %v152, %v148
    %v154 = vadd.f32 %v148, 1e-08
    %v155 = vlog2.pop %v154
    %v156 = vmul.f32 %v155, 0.6931472
    %v157 = vsub.f32 0.0, %v156
    %v158 = vrsqrt.pop %v154
    %v159 = vmul.f32 %v158, %v154
    %v160 = vmul.f32 %v159, %v158
    %v161 = vmul.f32 0.5, %v160
    %v162 = vsub.f32 1.5, %v161
    %v163 = vmul.f32 %v158, %v162
    %vm164 = vweird.f32 %v154
    %vm165 = vweird.f32 %v158
    %vm166 = vmor %vm164, %vm165
    %v167 = vsel %vm166, %v158, %v163
    %v168 = vld [vmem:[#allocation10] sm:$0xff]
    %v169 = vmul.f32 %v167, %v168
    %v170 = vadd.f32 %v153, %v169
    %171 = vst [vmem:[#allocation11] sm:$0xff] %v153
    %s172 = scalar_lea.vmem [#allocation11], 8
    %173 = vst [vmem:[%s172] sm:$0xff] %v157
    %s174 = scalar_lea.vmem [#allocation11], 16
    %175 = vst [vmem:[%s174] sm:$0xff] %v170
    // Predicated region
    $region46: #{tpu_custom_call.1} parent=1 // pred_check
      _
    $region47: #{tpu_custom_call.1} parent=1 // pred_check_branch
      %177 = sbr.rel (0) target = $region49
    $region48: #{tpu_custom_call.1} parent=1 // pred_region
      %179 = vsyncadd [#allocation4], 0
      %s180 = sshll.u32 [#allocation11], 4
      %s181 = int_to_ptr.vmem [resolvable:$true] %s180
      %s182 = sshll.u32 %s6, 4
      %s183 = int_to_ptr.hbm [resolvable:$true] %s182
      %188 = dma.vmem_to_hbm [thread:$0]  %s181, 384, %s183, [#allocation4], 128, 128, 8
    $region49: #{tpu_custom_call.1} parent=1 // pred_fallthru
      _
    // Predicated region
    $region50: #{tpu_custom_call.1} parent=1 // pred_check
      _
    $region51: #{tpu_custom_call.1} parent=1 // pred_check_branch
      %190 = sbr.rel (0) target = $region53
    $region52: #{tpu_custom_call.1} parent=1 // pred_region
      %192 = dma.done [#allocation4], 384
    $region53: #{tpu_custom_call.1} parent=1 // pred_fallthru
      _
    %193 = vsyncpa [#allocation3], 1
    %194 = vsyncpa [#allocation6], 1
    %195 = vsyncpa [#allocation9], 1
    %196 = vsyncpa [#allocation4], 1

</llo_original>
